<compile_context>
chip_gen: v7x
topology: tpu7x:2x2x1
jax: 0.10.0
libtpu: 0.0.40
codegen_flags: <defaults>
</compile_context>

<pallas_src>
import functools
import math

import jax
import jax.numpy as jnp
from jax import lax
from jax.experimental import pallas as pl
from jax.experimental.pallas import tpu as pltpu


def _round_up(x: int, m: int) -> int:
    return ((x + m - 1) // m) * m


def _dropout_kernel(seed_ref, x_ref, o_ref, *, threshold: int, inv_keep: float):
    """Elementwise dropout on a lane-dense (rows, 1024) tile, all in VMEM."""
    i = pl.program_id(0)
    rows, cols = x_ref.shape

    # Per-element global counter (uint32; wraps past 2^32 elements, fine for dropout).
    r = lax.broadcasted_iota(jnp.int32, (rows, cols), 0).astype(jnp.uint32)
    c = lax.broadcasted_iota(jnp.int32, (rows, cols), 1).astype(jnp.uint32)
    ctr = (i.astype(jnp.uint32) * jnp.uint32(rows) + r) * jnp.uint32(cols) + c

    # Stateless counter hash ("lowbias32") keyed by the seed. Portable: only
    # jnp integer ops, no pltpu.prng_* (which has no CPU/interpret lowering).
    key = seed_ref[0].astype(jnp.uint32) * jnp.uint32(0x9E3779B9)
    h = ctr + key
    h = (h ^ (h >> 16)) * jnp.uint32(0x7FEB352D)
    h = (h ^ (h >> 15)) * jnp.uint32(0x846CA68B)
    h = h ^ (h >> 16)

    # keep iff h >= threshold  ->  P(keep) = (2^32 - threshold) / 2^32 ~= 1 - p
    # (bias < 2^-32, same as any fixed-point threshold test).
    keep = h >= jnp.uint32(threshold)

    x = x_ref[...]
    scale = jnp.asarray(inv_keep, dtype=x.dtype)  # native-dtype compute (bf16 stays bf16)
    o_ref[...] = jnp.where(keep, x * scale, jnp.zeros_like(x))


def dropout_pallas(features: jax.Array, *, p: float, seed: int, training: bool = True):
    """Pallas dropout over arbitrarily shaped features (elementwise)."""
    if (not training) or p <= 0.0:
        return features  # nn.Dropout is the identity in eval mode / with p == 0.
    if p >= 1.0:
        return jnp.zeros_like(features)

    orig_shape = features.shape
    dtype = features.dtype
    total = int(math.prod(orig_shape))

    # Lane-dense slab: last dim = 1024 (multiple of 128) for unmasked full-lane stores.
    COLS = 1024
    rows = -(-total // COLS)
    # Row tile: up to 512 rows -> 512x1024 f32 = 2 MiB per buffer; with input+output
    # double-buffered that is <= 8 MiB VMEM, safe on v5e (16 MiB scoped default),
    # v6e (32 MiB) and v7x (32 MiB scoped / 64 MiB physical).
    row_tile = min(512, _round_up(max(rows, 1), 8))
    rows_padded = _round_up(rows, row_tile)
    padded_total = rows_padded * COLS
    grid = rows_padded // row_tile

    flat = features.reshape(-1)
    if padded_total != total:
        flat = jnp.pad(flat, (0, padded_total - total))
    slab = flat.reshape(rows_padded, COLS)

    seed_arr = jnp.asarray([seed], dtype=jnp.int32)
    threshold = min(int(round(p * 4294967296.0)), 4294967295)
    kernel = functools.partial(
        _dropout_kernel, threshold=threshold, inv_keep=1.0 / (1.0 - p)
    )

    itemsize = jnp.dtype(dtype).itemsize
    out = pl.pallas_call(
        kernel,
        out_shape=jax.ShapeDtypeStruct((rows_padded, COLS), dtype),
        grid_spec=pltpu.PrefetchScalarGridSpec(
            num_scalar_prefetch=1,  # seed lands in SMEM
            grid=(grid,),
            in_specs=[pl.BlockSpec((row_tile, COLS), lambda i, seed: (i, 0))],
            out_specs=pl.BlockSpec((row_tile, COLS), lambda i, seed: (i, 0)),
        ),
        compiler_params=pltpu.CompilerParams(
            # No carried state between blocks (stateless per-element hash), so the
            # grid is safely parallel -> v7x's 2 TensorCores split the work.
            dimension_semantics=("parallel",),
        ),
        cost_estimate=pl.CostEstimate(
            flops=8 * padded_total,
            transcendentals=0,
            bytes_accessed=2 * padded_total * itemsize,
        ),
    )(seed_arr, slab)

    out_flat = out.reshape(-1)
    if padded_total != total:
        out_flat = out_flat[:total]
    return out_flat.reshape(orig_shape)


class DropoutLayerPallas:
    """Mirror of the PyTorch DropoutLayer forward (dict in, dict out)."""

    def __init__(self, input_dim: int, p: float = 0.0, seed: int = 0):
        self.input_dim = input_dim
        self.output_dim = input_dim  # samedim=True
        self.p = p
        self.seed = seed
        self._calls = 0  # fresh mask per training step, like nn.Dropout

    def get_output_dim(self):
        return self.output_dim

    def forward(self, x: dict, training: bool = True, seed: int | None = None) -> dict:
        if seed is None:
            seed = self.seed + self._calls
            self._calls += 1
        features = dropout_pallas(
            x["features"], p=self.p, seed=seed, training=training
        )
        y = {k: v for k, v in x.items()}
        y["features"] = features
        return y


if __name__ == "__main__":
    key = jax.random.PRNGKey(0)
    B, N, D = 2, 8, 32  # batch, seq, hidden
    feats = jax.random.normal(key, (B, N, D), dtype=jnp.float32)
    batch = {"features": feats, "lengths": jnp.array([N, N], dtype=jnp.int32)}

    # --- training path with p = 0.5 ---
    layer = DropoutLayerPallas(input_dim=D, p=0.5, seed=1234)
    out = layer.forward(batch, training=True)
    y = jax.block_until_ready(out["features"])

    # sanity: kept elements equal x / (1 - p), dropped elements are exactly 0
    scale = 1.0 / (1.0 - 0.5)
    kept = y != 0.0
    assert y.shape == feats.shape and y.dtype == feats.dtype
    assert jnp.allclose(jnp.where(kept, y, 0.0),
                        jnp.where(kept, feats * scale, 0.0), atol=1e-5)
    # keep fraction should be roughly 1 - p
    keep_frac = float(jnp.mean(kept.astype(jnp.float32)))
    assert 0.3 < keep_frac < 0.7, f"keep fraction {keep_frac} far from 0.5"
    # passthrough of other dict keys
    assert jnp.array_equal(out["lengths"], batch["lengths"])

    # --- eval path / p = 0 is the identity ---
    layer_eval = DropoutLayerPallas(input_dim=D, p=0.0)
    out_eval = layer_eval.forward(batch, training=False)
    y_eval = jax.block_until_ready(out_eval["features"])
    assert jnp.array_equal(y_eval, feats)

    print("KERNEL_OK")
</pallas_src>

<mosaic_0001>
module attributes {stable_mosaic.version = 11 : i64} {
  func.func @_dropout_kernel(%arg0: i32, %arg1: memref<1xi32, #tpu.memory_space<smem>>, %arg2: memref<8x1024xf32, #tpu.memory_space<vmem>>, %arg3: memref<8x1024xf32, #tpu.memory_space<vmem>>) attributes {dimension_semantics = [#tpu.dimension_semantics<parallel>], iteration_bounds = array<i64: 1>, scalar_prefetch = 1 : i64, scratch_operands = 0 : i64, tpu.core_type = #tpu.core_type<tc>, window_params = [{transform_indices = @transform_0, window_bounds = array<i64: 8, 1024>}, {transform_indices = @transform_1, window_bounds = array<i64: 8, 1024>}]} {
    %0 = tpu.iota {dimensions = array<i32: 0>} : vector<8x1024xi32>
    %1 = tpu.iota {dimensions = array<i32: 1>} : vector<8x1024xi32>
    %c8_i32 = arith.constant 8 : i32
    %2 = arith.muli %arg0, %c8_i32 : i32
    %3 = vector.broadcast %2 : i32 to vector<8x1024xi32>
    %4 = arith.addi %3, %0 : vector<8x1024xi32>
    %c1024_i32 = arith.constant 1024 : i32
    %5 = vector.broadcast %c1024_i32 : i32 to vector<8x1024xi32>
    %6 = arith.muli %4, %5 : vector<8x1024xi32>
    %7 = arith.addi %6, %1 : vector<8x1024xi32>
    %c0 = arith.constant 0 : index
    %8 = memref.load %arg1[%c0] : memref<1xi32, #tpu.memory_space<smem>>
    %c-1640531527_i32 = arith.constant -1640531527 : i32
    %9 = arith.muli %8, %c-1640531527_i32 : i32
    %10 = vector.broadcast %9 : i32 to vector<8x1024xi32>
    %11 = arith.addi %7, %10 : vector<8x1024xi32>
    %c16_i32 = arith.constant 16 : i32
    %12 = vector.broadcast %c16_i32 : i32 to vector<8x1024xi32>
    %13 = arith.shrui %11, %12 : vector<8x1024xi32>
    %14 = arith.xori %11, %13 : vector<8x1024xi32>
    %c2146121005_i32 = arith.constant 2146121005 : i32
    %15 = vector.broadcast %c2146121005_i32 : i32 to vector<8x1024xi32>
    %16 = arith.muli %14, %15 : vector<8x1024xi32>
    %c15_i32 = arith.constant 15 : i32
    %17 = vector.broadcast %c15_i32 : i32 to vector<8x1024xi32>
    %18 = arith.shrui %16, %17 : vector<8x1024xi32>
    %19 = arith.xori %16, %18 : vector<8x1024xi32>
    %c-2073254261_i32 = arith.constant -2073254261 : i32
    %20 = vector.broadcast %c-2073254261_i32 : i32 to vector<8x1024xi32>
    %21 = arith.muli %19, %20 : vector<8x1024xi32>
    %c16_i32_0 = arith.constant 16 : i32
    %22 = vector.broadcast %c16_i32_0 : i32 to vector<8x1024xi32>
    %23 = arith.shrui %21, %22 : vector<8x1024xi32>
    %24 = arith.xori %21, %23 : vector<8x1024xi32>
    %c-2147483648_i32 = arith.constant -2147483648 : i32
    %25 = vector.broadcast %c-2147483648_i32 : i32 to vector<8x1024xi32>
    %26 = arith.cmpi uge, %24, %25 : vector<8x1024xi32>
    %c0_1 = arith.constant 0 : index
    %c0_2 = arith.constant 0 : index
    %27 = vector.load %arg2[%c0_1, %c0_2] : memref<8x1024xf32, #tpu.memory_space<vmem>>, vector<8x1024xf32>
    %cst = arith.constant 2.000000e+00 : f32
    %28 = vector.broadcast %cst : f32 to vector<8x1024xf32>
    %29 = arith.mulf %27, %28 : vector<8x1024xf32>
    %cst_3 = arith.constant 0.000000e+00 : f32
    %30 = vector.broadcast %cst_3 : f32 to vector<8x1024xf32>
    %31 = arith.select %26, %29, %30 : vector<8x1024xi1>, vector<8x1024xf32>
    %c0_4 = arith.constant 0 : index
    %c0_5 = arith.constant 0 : index
    %32 = vector.load %arg3[%c0_4, %c0_5] : memref<8x1024xf32, #tpu.memory_space<vmem>>, vector<8x1024xf32>
    tpu.vector_store %arg3[%c0_4, %c0_5], %31 {strides = array<i32>} : memref<8x1024xf32, #tpu.memory_space<vmem>>, vector<8x1024xf32>,
    return
  }
  func.func @transform_0(%arg0: i32, %arg1: memref<1xi32, #tpu.memory_space<smem>>) -> (i32, i32) {
    %c0_i32 = arith.constant 0 : i32
    %c0_i32_0 = arith.constant 0 : i32
    return %arg0, %c0_i32 : i32, i32
  }
  func.func @transform_1(%arg0: i32, %arg1: memref<1xi32, #tpu.memory_space<smem>>) -> (i32, i32) {
    %c0_i32 = arith.constant 0 : i32
    %c0_i32_0 = arith.constant 0 : i32
    return %arg0, %c0_i32 : i32, i32
  }
}

</mosaic_0001>

<llo_original>
// kernel: tpu_custom_call.1
$region0: #{tpu_custom_call.1}
  #allocation0 [shape = 'u32[]', space=smem, size = 0x4, offset = 0x4, fixed_abs, tag = 'smem constant byte address 0x4 - core index']
  #allocation1 [shape = 'u32[144,128]{1,0:T(1,128)}', space=vmem, size = 0x12000, scoped, tag = 'internal scratch']
  #allocation2 [shape = 's32[1]{0}', space=sflag, size = 0x4, scoped, tag = 'scoped memory for tpu_custom_call.1']
  #allocation3 [shape = 's32[1]{0:T(128)S(6)}', space=smem, size = 0x200, scoped, tag = 'prefetched SMEM operand 0']
  %s0 = inlined_call_operand.<no memory space> [shape: s32[1], index: 0, kind: input, shape index: {}]
  %s1 = inlined_call_operand.hbm [shape: f32[8,1024], index: 1, kind: input, shape index: {}]
  %s2 = inlined_call_operand.hbm [shape: f32[8,1024], index: 2, kind: output, shape index: {}]
  %s3 = sld [smem:[#allocation0]]
  $region18: #{tpu_custom_call.1} parent=0
    _
  %s5 = ssub.s32 1, %s3
  %s6 = scalar_select 0, %s5, %s3
  %7 = sst [smem:[#allocation3]] %s0
  $region1: #{tpu_custom_call.1} parent=0
    #allocation4 [shape = 'u8[32768]{0}', space=vmem, size = 0x8000, scoped, tag = 'input window, operand 1, single buffered']
    #allocation5 [shape = 's32[1]{0}', space=sflag, size = 0x4, scoped, tag = 'scoped memory for tpu_custom_call.1']
    #allocation6 [shape = 's32[1]{0}', space=sflag, size = 0x4, scoped, tag = 'scoped memory for tpu_custom_call.1']
    #allocation7 [shape = 'u8[32768]{0}', space=vmem, size = 0x8000, scoped, tag = 'output window, operand 0, single buffered']
    %8 = vsyncpa [#allocation5], 0
    %9 = vsyncpa [#allocation6], 0
    // Predicated region
    $region2: #{tpu_custom_call.1} parent=1 // pred_check
      _
    $region3: #{tpu_custom_call.1} parent=1 // pred_check_branch
      %11 = sbr.rel (0) target = $region5
    $region4: #{tpu_custom_call.1} parent=1 // pred_region
      %s13 = ssub.s32 1024, 1024
      %14 = vsyncadd [#allocation5], %s13
      %s16 = sshll.u32 [#allocation4], 4
      %s17 = int_to_ptr.vmem [resolvable:$true] %s16
      %19 = dma.hbm_to_vmem [thread:$0]  %s1, 1024, %s17, [#allocation5]
    $region5: #{tpu_custom_call.1} parent=1 // pred_fallthru
      _
    // Predicated region
    $region6: #{tpu_custom_call.1} parent=1 // pred_check
      _
    $region7: #{tpu_custom_call.1} parent=1 // pred_check_branch
      %21 = sbr.rel (0) target = $region9
    $region8: #{tpu_custom_call.1} parent=1 // pred_region
      %22 = dma.done [#allocation5], 1024
    $region9: #{tpu_custom_call.1} parent=1 // pred_fallthru
      _
    %v23 = vlaneseq
    %v24 = vshrl.u32 %v23, 7
    %v25 = vlaneseq
    %v26 = vand.u32 %v25, 127
    %v27 = vadd.s32 %v26, 128
    %v28 = vadd.s32 %v26, 256
    %v29 = vadd.s32 %v26, 384
    %v30 = vadd.s32 %v26, 512
    %v31 = vadd.s32 %v26, 640
    %v32 = vadd.s32 %v26, 768
    %v33 = vadd.s32 %v26, 896
    %s34 = smul.u32 0, 8
    %v35 = vstv %s34
    %v36 = vadd.s32 %v35, %v24
    %v37 = vmul.u32 %v36, 1024
    %v38 = vadd.s32 %v37, %v26
    %v39 = vadd.s32 %v37, %v27
    %v40 = vadd.s32 %v37, %v28
    %v41 = vadd.s32 %v37, %v29
    %v42 = vadd.s32 %v37, %v30
    %v43 = vadd.s32 %v37, %v31
    %v44 = vadd.s32 %v37, %v32
    %v45 = vadd.s32 %v37, %v33
    %s46 = sld [smem:[#allocation3]]
    %s47 = smul.u32 %s46, 2654435769
    %v48 = vstv %s47
    %v49 = vadd.s32 %v38, %v48
    %v50 = vadd.s32 %v39, %v48
    %v51 = vadd.s32 %v40, %v48
    %v52 = vadd.s32 %v41, %v48
    %v53 = vadd.s32 %v42, %v48
    %v54 = vadd.s32 %v43, %v48
    %v55 = vadd.s32 %v44, %v48
    %v56 = vadd.s32 %v45, %v48
    %v57 = vshrl.u32 %v49, 16
    %v58 = vshrl.u32 %v50, 16
    %v59 = vshrl.u32 %v51, 16
    %v60 = vshrl.u32 %v52, 16
    %v61 = vshrl.u32 %v53, 16
    %v62 = vshrl.u32 %v54, 16
    %v63 = vshrl.u32 %v55, 16
    %v64 = vshrl.u32 %v56, 16
    %v65 = vxor.u32 %v49, %v57
    %v66 = vxor.u32 %v50, %v58
    %v67 = vxor.u32 %v51, %v59
    %v68 = vxor.u32 %v52, %v60
    %v69 = vxor.u32 %v53, %v61
    %v70 = vxor.u32 %v54, %v62
    %v71 = vxor.u32 %v55, %v63
    %v72 = vxor.u32 %v56, %v64
    %v73 = vmul.u32 %v65, 2146121005
    %v74 = vmul.u32 %v66, 2146121005
    %v75 = vmul.u32 %v67, 2146121005
    %v76 = vmul.u32 %v68, 2146121005
    %v77 = vmul.u32 %v69, 2146121005
    %v78 = vmul.u32 %v70, 2146121005
    %v79 = vmul.u32 %v71, 2146121005
    %v80 = vmul.u32 %v72, 2146121005
    %v81 = vshrl.u32 %v73, 15
    %v82 = vshrl.u32 %v74, 15
    %v83 = vshrl.u32 %v75, 15
    %v84 = vshrl.u32 %v76, 15
    %v85 = vshrl.u32 %v77, 15
    %v86 = vshrl.u32 %v78, 15
    %v87 = vshrl.u32 %v79, 15
    %v88 = vshrl.u32 %v80, 15
    %v89 = vxor.u32 %v73, %v81
    %v90 = vxor.u32 %v74, %v82
    %v91 = vxor.u32 %v75, %v83
    %v92 = vxor.u32 %v76, %v84
    %v93 = vxor.u32 %v77, %v85
    %v94 = vxor.u32 %v78, %v86
    %v95 = vxor.u32 %v79, %v87
    %v96 = vxor.u32 %v80, %v88
    %v97 = vmul.u32 %v89, 2221713035
    %v98 = vmul.u32 %v90, 2221713035
    %v99 = vmul.u32 %v91, 2221713035
    %v100 = vmul.u32 %v92, 2221713035
    %v101 = vmul.u32 %v93, 2221713035
    %v102 = vmul.u32 %v94, 2221713035
    %v103 = vmul.u32 %v95, 2221713035
    %v104 = vmul.u32 %v96, 2221713035
    %v105 = vshrl.u32 %v97, 16
    %v106 = vshrl.u32 %v98, 16
    %v107 = vshrl.u32 %v99, 16
    %v108 = vshrl.u32 %v100, 16
    %v109 = vshrl.u32 %v101, 16
    %v110 = vshrl.u32 %v102, 16
    %v111 = vshrl.u32 %v103, 16
    %v112 = vshrl.u32 %v104, 16
    %v113 = vxor.u32 %v97, %v105
    %v114 = vxor.u32 %v98, %v106
    %v115 = vxor.u32 %v99, %v107
    %v116 = vxor.u32 %v100, %v108
    %v117 = vxor.u32 %v101, %v109
    %v118 = vxor.u32 %v102, %v110
    %v119 = vxor.u32 %v103, %v111
    %v120 = vxor.u32 %v104, %v112
    %vm121 = vcmp.ge.u32.totalorder %v113, 2147483648
    %vm122 = vcmp.ge.u32.totalorder %v114, 2147483648
    %vm123 = vcmp.ge.u32.totalorder %v115, 2147483648
    %vm124 = vcmp.ge.u32.totalorder %v116, 2147483648
    %vm125 = vcmp.ge.u32.totalorder %v117, 2147483648
    %vm126 = vcmp.ge.u32.totalorder %v118, 2147483648
    %vm127 = vcmp.ge.u32.totalorder %v119, 2147483648
    %vm128 = vcmp.ge.u32.totalorder %v120, 2147483648
    %v129 = vld [vmem:[#allocation4] sm:$0xff]
    %v130 = vld [vmem:[#allocation4 + $0x8] sm:$0xff]
    %v131 = vld [vmem:[#allocation4 + $0x10] sm:$0xff]
    %v132 = vld [vmem:[#allocation4 + $0x18] sm:$0xff]
    %v133 = vld [vmem:[#allocation4 + $0x20] sm:$0xff]
    %v134 = vld [vmem:[#allocation4 + $0x28] sm:$0xff]
    %v135 = vld [vmem:[#allocation4 + $0x30] sm:$0xff]
    %v136 = vld [vmem:[#allocation4 + $0x38] sm:$0xff]
    %v137 = vmul.f32 %v129, 2.0
    %v138 = vmul.f32 %v130, 2.0
    %v139 = vmul.f32 %v131, 2.0
    %v140 = vmul.f32 %v132, 2.0
    %v141 = vmul.f32 %v133, 2.0
    %v142 = vmul.f32 %v134, 2.0
    %v143 = vmul.f32 %v135, 2.0
    %v144 = vmul.f32 %v136, 2.0
    %v145 = vsel %vm121, %v137, 0.0
    %v146 = vsel %vm122, %v138, 0.0
    %v147 = vsel %vm123, %v139, 0.0
    %v148 = vsel %vm124, %v140, 0.0
    %v149 = vsel %vm125, %v141, 0.0
    %v150 = vsel %vm126, %v142, 0.0
    %v151 = vsel %vm127, %v143, 0.0
    %v152 = vsel %vm128, %v144, 0.0
    %153 = vst [vmem:[#allocation7] sm:$0xff] %v145
    %154 = vst [vmem:[#allocation7 + $0x8] sm:$0xff] %v146
    %155 = vst [vmem:[#allocation7 + $0x10] sm:$0xff] %v147
    %156 = vst [vmem:[#allocation7 + $0x18] sm:$0xff] %v148
    %157 = vst [vmem:[#allocation7 + $0x20] sm:$0xff] %v149
    %158 = vst [vmem:[#allocation7 + $0x28] sm:$0xff] %v150
    %159 = vst [vmem:[#allocation7 + $0x30] sm:$0xff] %v151
    %160 = vst [vmem:[#allocation7 + $0x38] sm:$0xff] %v152
    // Predicated region
    $region10: #{tpu_custom_call.1} parent=1 // pred_check
      _
    $region11: #{tpu_custom_call.1} parent=1 // pred_check_branch
      %162 = sbr.rel (0) target = $region13
    $region12: #{tpu_custom_call.1} parent=1 // pred_region
      %s164 = ssub.s32 1024, 1024
      %165 = vsyncadd [#allocation6], %s164
      %s167 = sshll.u32 [#allocation7], 4
      %s168 = int_to_ptr.vmem [resolvable:$true] %s167
      %170 = dma.vmem_to_hbm [thread:$0]  %s168, 1024, %s2, [#allocation6]
    $region13: #{tpu_custom_call.1} parent=1 // pred_fallthru
      _
    // Predicated region
    $region14: #{tpu_custom_call.1} parent=1 // pred_check
      _
    $region15: #{tpu_custom_call.1} parent=1 // pred_check_branch
      %172 = sbr.rel (0) target = $region17
    $region16: #{tpu_custom_call.1} parent=1 // pred_region
      %173 = dma.done [#allocation6], 1024
    $region17: #{tpu_custom_call.1} parent=1 // pred_fallthru
      _
    %174 = vsyncpa [#allocation5], 1
    %175 = vsyncpa [#allocation6], 1

</llo_original>
